<compile_context>
chip_gen: v7x
topology: tpu7x:2x2x1
jax: 0.10.0
libtpu: 0.0.40
codegen_flags: <defaults>
</compile_context>

<pallas_src>
import functools
from dataclasses import dataclass

import jax
import jax.numpy as jnp
from jax.experimental import pallas as pl
from jax.experimental.pallas import tpu as pltpu


# ----------------------------------------------------------------------------
# Roll-convention probe (tiny kernel, run once): guarantees the shift direction
# used for in-kernel im2col matches jnp.roll semantics regardless of backend.
# ----------------------------------------------------------------------------
def _roll_probe_kernel(x_ref, o_ref):
    o_ref[...] = pltpu.roll(x_ref[...], 1, axis=0)


def detect_roll_like_jnp():
    """True iff pltpu.roll(x, s, axis)[i] == x[i - s]  (i.e. jnp.roll semantics)."""
    x = jnp.arange(8 * 128, dtype=jnp.float32).reshape(8, 128)
    y = pl.pallas_call(
        _roll_probe_kernel,
        out_shape=jax.ShapeDtypeStruct((8, 128), jnp.float32),
    )(x)
    # jnp.roll semantics -> y[0,0] == x[7,0] == 896 ; opposite -> y[0,0] == 128
    return bool(jax.device_get(y)[0, 0] > 500.0)


# ----------------------------------------------------------------------------
# Fused ConvLSTM forward kernel: one batch element per grid index; the whole
# temporal recurrence (warm-up + generation), both layers and the 1x1 output
# conv run inside the kernel body.
# ----------------------------------------------------------------------------
def _make_fused_convlstm_kernel(*, H, W, hiddens, K, T_warm, T_gen, roll_like_jnp):
    HW = H * W
    KK = K * K
    pad = K // 2
    L = len(hiddens)

    def kernel(*refs):
        frames_ref = refs[0]                 # (1, T_warm, HW, Cf)  f32
        w_refs = refs[1:1 + L]               # packed (KK*(Cin_l+Ch_l), 4*Ch_l) bf16
        wlast_ref = refs[1 + L]              # (Ch_last, Cf) bf16
        out_ref = refs[2 + L]                # (1, T_gen, HW, Cf) f32

        # ---- boundary masks (hoisted: computed once per sequence, reused everywhere)
        lin = jax.lax.broadcasted_iota(jnp.int32, (HW, 1), 0)
        hh = lin // W
        ww = lin - hh * W
        tap_masks = []
        for tp in range(KK):
            dh = tp // K - pad
            dw = tp % K - pad
            conds = []
            if dh > 0:
                conds.append(hh < H - dh)
            elif dh < 0:
                conds.append(hh >= -dh)
            if dw > 0:
                conds.append(ww < W - dw)
            elif dw < 0:
                conds.append(ww >= -dw)
            valid = None
            for c in conds:
                valid = c if valid is None else (valid & c)
            tap_masks.append(valid)          # (HW, 1) bool or None (center tap)

        # ---- weights loaded once, held for the whole sequence
        w_vals = [w_refs[l][...] for l in range(L)]
        w_last = wlast_ref[...]

        def cell(l, x, h, c):
            """One ConvLSTM cell step. x: (HW, Cin_l) f32, h/c: (HW, Ch_l) f32."""
            ch = hiddens[l]
            xh = jnp.concatenate([x, h], axis=1)             # (HW, Cin+Ch) f32
            taps = []
            for tp in range(KK):
                dh = tp // K - pad
                dw = tp % K - pad
                d = dh * W + dw
                if d == 0:
                    sh = xh
                else:
                    amt = ((-d) % HW) if roll_like_jnp else (d % HW)
                    sh = pltpu.roll(xh, amt, axis=0)
                if tap_masks[tp] is not None:
                    sh = jnp.where(tap_masks[tp], sh, 0.0)
                taps.append(sh)
            # im2col slab; single wide-K matmul on the MXU (bf16 in, f32 acc).
            slab = jnp.concatenate(taps, axis=1).astype(jnp.bfloat16)   # (HW, KK*(Cin+Ch))
            acc = jnp.dot(slab, w_vals[l],
                          preferred_element_type=jnp.float32)           # (HW, 4*Ch)
            # gate order [i | f | g | o] (matches torch.split on the channel dim)
            i_t = jax.nn.sigmoid(acc[:, 0 * ch:1 * ch])
            f_t = jax.nn.sigmoid(acc[:, 1 * ch:2 * ch] + 1.0)   # _forget_bias = 1.0
            g_t = jnp.tanh(acc[:, 2 * ch:3 * ch])
            o_t = jax.nn.sigmoid(acc[:, 3 * ch:4 * ch])
            c_new = f_t * c + i_t * g_t
            h_new = o_t * jnp.tanh(c_new)
            return h_new, c_new

        def all_layers(x, hs, cs):
            new_hs, new_cs = [], []
            cur = x
            for l in range(L):
                hn, cn = cell(l, cur, hs[l], cs[l])
                new_hs.append(hn)
                new_cs.append(cn)
                cur = hn
            return new_hs, new_cs

        hs = [jnp.zeros((HW, hiddens[l]), jnp.float32) for l in range(L)]
        cs = [jnp.zeros((HW, hiddens[l]), jnp.float32) for l in range(L)]

        # ---- warm-up: observed frames drive the recurrence (no x_gen work here)
        for t in range(T_warm):
            x0 = frames_ref[0, t]                          # (HW, Cf) f32, static index
            hs, cs = all_layers(x0, hs, cs)

        # ---- generation: 1x1 output conv on the top hidden state, then feed back
        for tg in range(T_gen):
            x_gen = jnp.dot(hs[L - 1].astype(jnp.bfloat16), w_last,
                            preferred_element_type=jnp.float32)        # (HW, Cf)
            out_ref[0, tg] = x_gen.astype(out_ref.dtype)
            if tg < T_gen - 1:          # the last step's state update is never consumed
                hs, cs = all_layers(x_gen, hs, cs)

    return kernel


# ----------------------------------------------------------------------------
# Model config / params / forward
# ----------------------------------------------------------------------------
@dataclass(frozen=True)
class Configs:
    in_shape: tuple = (8, 1, 32, 32)   # (T, C, H, W)
    patch_size: int = 2
    filter_size: int = 3
    stride: int = 1                    # stride=1 assumed (default config)
    layer_norm: bool = False           # TODO(synk): layer_norm=True branch not implemented
    pre_seq_length: int = 8
    aft_seq_length: int = 4


def init_params(key, configs, num_layers, num_hidden):
    T, C, H, W = configs.in_shape
    frame_channel = configs.patch_size * configs.patch_size * C
    K = configs.filter_size
    params = {}
    keys = jax.random.split(key, 2 * num_layers + 1)
    for i in range(num_layers):
        in_ch = frame_channel if i == 0 else num_hidden[i - 1]
        params[f"wx{i}"] = 0.02 * jax.random.normal(
            keys[2 * i], (K * K, in_ch, 4 * num_hidden[i]), jnp.float32)
        params[f"wh{i}"] = 0.02 * jax.random.normal(
            keys[2 * i + 1], (K * K, num_hidden[i], 4 * num_hidden[i]), jnp.float32)
    params["w_last"] = 0.02 * jax.random.normal(
        keys[-1], (num_hidden[-1], frame_channel), jnp.float32)
    return params


def convlstm_forward(frames, params, *, configs, num_layers, num_hidden,
                     roll_like_jnp):
    """frames: (B, T, frame_channel, H', W')  ->  (B, aft_seq, frame_channel, H', W')."""
    B, T, Cf, H, W = frames.shape
    HW = H * W
    K = configs.filter_size
    T_gen = configs.aft_seq_length

    # NCHW -> NHWC-flat glue (one cheap transpose, done once)
    frames_f = jnp.transpose(frames, (0, 1, 3, 4, 2)).reshape(B, T, HW, Cf)
    frames_f = frames_f.astype(jnp.float32)

    # pack per-layer conv weights into a single wide-K matrix:
    # row = tap * (Cin + Ch) + channel, channels ordered [x-channels | h-channels]
    w_packed = []
    for i in range(num_layers):
        cin = Cf if i == 0 else num_hidden[i - 1]
        ch = num_hidden[i]
        w = jnp.concatenate([params[f"wx{i}"], params[f"wh{i}"]], axis=1)  # (KK, cin+ch, 4ch)
        w_packed.append(w.reshape(K * K * (cin + ch), 4 * ch).astype(jnp.bfloat16))
    w_last = params["w_last"].astype(jnp.bfloat16)

    kernel = _make_fused_convlstm_kernel(
        H=H, W=W, hiddens=tuple(num_hidden), K=K,
        T_warm=T, T_gen=T_gen, roll_like_jnp=roll_like_jnp)

    in_specs = [pl.BlockSpec((1, T, HW, Cf), lambda b: (b, 0, 0, 0))]
    inputs = [frames_f]
    for w in w_packed:
        in_specs.append(pl.BlockSpec(w.shape, lambda b: (0, 0)))
        inputs.append(w)
    in_specs.append(pl.BlockSpec(w_last.shape, lambda b: (0, 0)))
    inputs.append(w_last)

    out = pl.pallas_call(
        kernel,
        grid=(B,),
        in_specs=in_specs,
        out_specs=pl.BlockSpec((1, T_gen, HW, Cf), lambda b: (b, 0, 0, 0)),
        out_shape=jax.ShapeDtypeStruct((B, T_gen, HW, Cf), jnp.float32),
        compiler_params=pltpu.CompilerParams(
            dimension_semantics=("parallel",)),
    )(*inputs)

    out = out.reshape(B, T_gen, H, W, Cf)
    return jnp.transpose(out, (0, 1, 4, 2, 3))   # back to (B, S, C, H, W)


# ----------------------------------------------------------------------------
# Pure-JAX reference of the PyTorch module (for correctness checking only).
# Matmul / conv operands are cast to bf16 with f32 accumulation to mirror the
# kernel's MXU numerics (perf review item), so the tolerance stays tight.
# ----------------------------------------------------------------------------
def reference_forward(frames, params, *, configs, num_layers, num_hidden):
    B, T, Cf, H, W = frames.shape
    K = configs.filter_size
    x_seq = jnp.transpose(frames, (0, 1, 3, 4, 2))   # (B, T, H, W, Cf)

    def conv_same(x, w_taps):
        cin, cout = w_taps.shape[1], w_taps.shape[2]
        w = w_taps.reshape(K, K, cin, cout).astype(jnp.bfloat16)
        return jax.lax.conv_general_dilated(
            x.astype(jnp.bfloat16), w, window_strides=(1, 1), padding="SAME",
            dimension_numbers=("NHWC", "HWIO", "NHWC"),
            preferred_element_type=jnp.float32)

    def cell(i, x, h, c):
        ch = num_hidden[i]
        a = conv_same(x, params[f"wx{i}"]) + conv_same(h, params[f"wh{i}"])
        i_t = jax.nn.sigmoid(a[..., 0 * ch:1 * ch])
        f_t = jax.nn.sigmoid(a[..., 1 * ch:2 * ch] + 1.0)
        g_t = jnp.tanh(a[..., 2 * ch:3 * ch])
        o_t = jax.nn.sigmoid(a[..., 3 * ch:4 * ch])
        c_new = f_t * c + i_t * g_t
        h_new = o_t * jnp.tanh(c_new)
        return h_new, c_new

    h = [jnp.zeros((B, H, W, num_hidden[i]), jnp.float32) for i in range(num_layers)]
    c = [jnp.zeros((B, H, W, num_hidden[i]), jnp.float32) for i in range(num_layers)]
    for t in range(T):
        net = x_seq[:, t]
        h[0], c[0] = cell(0, net, h[0], c[0])
        for i in range(1, num_layers):
            h[i], c[i] = cell(i, h[i - 1], h[i], c[i])
    w_last_bf = params["w_last"].astype(jnp.bfloat16)
    outs = []
    for _ in range(configs.aft_seq_length):
        x_gen = jnp.einsum("bhwc,cf->bhwf", h[num_layers - 1].astype(jnp.bfloat16),
                           w_last_bf, preferred_element_type=jnp.float32)
        h[0], c[0] = cell(0, x_gen, h[0], c[0])
        for i in range(1, num_layers):
            h[i], c[i] = cell(i, h[i - 1], h[i], c[i])
        outs.append(x_gen)
    out = jnp.stack(outs, axis=1)                 # (B, S, H, W, Cf)
    return jnp.transpose(out, (0, 1, 4, 2, 3))    # (B, S, Cf, H, W)


# ----------------------------------------------------------------------------
# Main
# ----------------------------------------------------------------------------
if __name__ == "__main__":
    configs = Configs()
    num_layers = 2
    num_hidden = (32, 32)

    T, C, H, W = configs.in_shape
    frame_channel = configs.patch_size * configs.patch_size * C          # 4
    height = H // configs.patch_size                                     # 16
    width = W // configs.patch_size                                      # 16
    batch = 2

    key = jax.random.PRNGKey(0)
    k_params, k_data = jax.random.split(key)
    params = init_params(k_params, configs, num_layers, num_hidden)

    # frames_tensor: [batch, T, frame_channel, height, width]  (patch-embedded, BTCHW)
    frames = jax.random.normal(
        k_data, (batch, T, frame_channel, height, width), jnp.float32)

    roll_like_jnp = detect_roll_like_jnp()

    fwd = jax.jit(functools.partial(
        convlstm_forward, configs=configs, num_layers=num_layers,
        num_hidden=num_hidden, roll_like_jnp=roll_like_jnp))

    out = fwd(frames, params)
    jax.block_until_ready(out)

    expected_shape = (batch, configs.aft_seq_length, frame_channel, height, width)
    assert out.shape == expected_shape, (out.shape, expected_shape)
    assert bool(jnp.isfinite(out).all())

    # correctness check against a pure-JAX reference with matching (bf16-in / f32-acc)
    # matmul numerics; differences are f32 accumulation-order noise only.
    ref = jax.block_until_ready(
        reference_forward(frames, params, configs=configs,
                          num_layers=num_layers, num_hidden=num_hidden))
    max_err = float(jnp.max(jnp.abs(out - ref)))
    assert max_err < 2e-3, f"mismatch vs reference: {max_err}"

    print("KERNEL_OK")
</pallas_src>

<mosaic_0001>
module attributes {stable_mosaic.version = 11 : i64} {
  func.func @_roll_probe_kernel(%arg0: memref<8x128xf32, #tpu.memory_space<vmem>>, %arg1: memref<8x128xf32, #tpu.memory_space<vmem>>) attributes {dimension_semantics = [], scalar_prefetch = 0 : i64, scratch_operands = 0 : i64, tpu.core_type = #tpu.core_type<tc>} {
    %c0 = arith.constant 0 : index
    %c0_0 = arith.constant 0 : index
    %0 = vector.load %arg0[%c0, %c0_0] : memref<8x128xf32, #tpu.memory_space<vmem>>, vector<8x128xf32>
    %c1_i32 = arith.constant 1 : i32
    %1 = tpu.dynamic_rotate %0 by %c1_i32 dim 0 : vector<8x128xf32>, i32 -> vector<8x128xf32>
    %c0_1 = arith.constant 0 : index
    %c0_2 = arith.constant 0 : index
    %2 = vector.load %arg1[%c0_1, %c0_2] : memref<8x128xf32, #tpu.memory_space<vmem>>, vector<8x128xf32>
    tpu.vector_store %arg1[%c0_1, %c0_2], %1 {strides = array<i32>} : memref<8x128xf32, #tpu.memory_space<vmem>>, vector<8x128xf32>,
    return
  }
}

</mosaic_0001>

<llo_original>
// kernel: tpu_custom_call.1
$region0: #{tpu_custom_call.1}
  #allocation0 [shape = 'u32[]', space=smem, size = 0x4, offset = 0x4, fixed_abs, tag = 'smem constant byte address 0x4 - core index']
  #allocation1 [shape = 'u32[144,128]{1,0:T(1,128)}', space=vmem, size = 0x12000, scoped, tag = 'internal scratch']
  %s0 = inlined_call_operand.hbm [shape: f32[8,128], index: 0, kind: input, shape index: {}]
  %s1 = inlined_call_operand.hbm [shape: f32[8,128], index: 1, kind: output, shape index: {}]
  %s2 = sld [smem:[#allocation0]]
  $region18: #{tpu_custom_call.1} parent=0
    _
  %s4 = ssub.s32 1, %s2
  %s5 = scalar_select 0, %s4, %s2
  $region1: #{tpu_custom_call.1} parent=0
    #allocation2 [shape = 'u8[4096]{0}', space=vmem, size = 0x1000, scoped, tag = 'input window, operand 0, single buffered']
    #allocation3 [shape = 's32[1]{0}', space=sflag, size = 0x4, scoped, tag = 'scoped memory for tpu_custom_call.1']
    #allocation4 [shape = 's32[1]{0}', space=sflag, size = 0x4, scoped, tag = 'scoped memory for tpu_custom_call.1']
    #allocation5 [shape = 'u8[4096]{0}', space=vmem, size = 0x1000, scoped, tag = 'output window, operand 0, single buffered']
    %6 = vsyncpa [#allocation3], 0
    %7 = vsyncpa [#allocation4], 0
    // Predicated region
    $region2: #{tpu_custom_call.1} parent=1 // pred_check
      _
    $region3: #{tpu_custom_call.1} parent=1 // pred_check_branch
      %9 = sbr.rel (0) target = $region5
    $region4: #{tpu_custom_call.1} parent=1 // pred_region
      %s11 = ssub.s32 128, 128
      %12 = vsyncadd [#allocation3], %s11
      %s14 = sshll.u32 [#allocation2], 4
      %s15 = int_to_ptr.vmem [resolvable:$true] %s14
      %17 = dma.hbm_to_vmem [thread:$0]  %s0, 128, %s15, [#allocation3]
    $region5: #{tpu_custom_call.1} parent=1 // pred_fallthru
      _
    // Predicated region
    $region6: #{tpu_custom_call.1} parent=1 // pred_check
      _
    $region7: #{tpu_custom_call.1} parent=1 // pred_check_branch
      %19 = sbr.rel (0) target = $region9
    $region8: #{tpu_custom_call.1} parent=1 // pred_region
      %20 = dma.done [#allocation3], 128
    $region9: #{tpu_custom_call.1} parent=1 // pred_fallthru
      _
    %v21 = vld [vmem:[#allocation2] sm:$0xff]
    %v22 = vrot.slane %v21, 7
    %23 = vst [vmem:[#allocation5] sm:$0xff] %v22
    // Predicated region
    $region10: #{tpu_custom_call.1} parent=1 // pred_check
      _
    $region11: #{tpu_custom_call.1} parent=1 // pred_check_branch
      %25 = sbr.rel (0) target = $region13
    $region12: #{tpu_custom_call.1} parent=1 // pred_region
      %s27 = ssub.s32 128, 128
      %28 = vsyncadd [#allocation4], %s27
      %s30 = sshll.u32 [#allocation5], 4
      %s31 = int_to_ptr.vmem [resolvable:$true] %s30
      %33 = dma.vmem_to_hbm [thread:$0]  %s31, 128, %s1, [#allocation4]
    $region13: #{tpu_custom_call.1} parent=1 // pred_fallthru
      _
    // Predicated region
    $region14: #{tpu_custom_call.1} parent=1 // pred_check
      _
    $region15: #{tpu_custom_call.1} parent=1 // pred_check_branch
      %35 = sbr.rel (0) target = $region17
    $region16: #{tpu_custom_call.1} parent=1 // pred_region
      %36 = dma.done [#allocation4], 128
    $region17: #{tpu_custom_call.1} parent=1 // pred_fallthru
      _
    %37 = vsyncpa [#allocation3], 1
    %38 = vsyncpa [#allocation4], 1

</llo_original>
